<compile_context>
chip_gen: v6e
topology: v6e:2x2x1
jax: 0.10.0
libtpu: 0.0.40
codegen_flags: <defaults>
</compile_context>

<pallas_src>
import jax
import jax.numpy as jnp
from jax.experimental import pallas as pl
from jax.experimental.pallas import tpu as pltpu


def _round_up(x: int, m: int) -> int:
    return ((x + m - 1) // m) * m


def _sublane_multiple(dtype) -> int:
    """Packed-sublane multiple: 8 for 4-byte, 16 for 2-byte, 32 for 1-byte."""
    return max(8, 32 // jnp.dtype(dtype).itemsize)


def _chip_config():
    """Return (per_buffer_budget_bytes, vmem_limit_bytes_or_None, two_tensorcores)."""
    kind = ""
    try:
        kind = jax.devices()[0].device_kind.lower()
    except Exception:  # pragma: no cover - defensive, fall back to safe config
        pass
    if "v7" in kind:
        # 64 MiB physical VMEM per TC, ~3.2 TB/s HBM: big tiles amortize the
        # ~0.35 us per-grid-step overhead. 4 live buffers * 10 MiB = 40 MiB.
        return 10 << 20, 48 << 20, True
    if "v6" in kind or "v5p" in kind or "v4" in kind:
        # 128 MiB physical VMEM; already near the ~85% HBM-roofline plateau.
        return 6 << 20, 32 << 20, ("v5p" in kind or "v4" in kind)
    # v5e / unknown: 16 MiB default scoped VMEM -> 4 * 3 MiB = 12 MiB fits.
    return 3 << 20, None, False


def _pick_tiles(batch: int, hidden: int, dtype, budget: int,
                two_tc: bool) -> tuple[int, int]:
    """Pick (tile_b, tile_h): as large as the per-buffer budget allows, with
    lane tiling for very wide hidden and an even >=2 batch grid on 2-TC chips."""
    itemsize = jnp.dtype(dtype).itemsize
    sub = _sublane_multiple(dtype)

    # Lane (hidden) tile: full hidden if even a minimal sublane block fits the
    # budget, otherwise tile hidden in multiples of 128 (keeps stores lane-dense).
    if hidden <= 128 or sub * hidden * itemsize <= budget:
        tile_h = hidden
    else:
        lanes = budget // (sub * itemsize)
        tile_h = min(hidden, max(128, (lanes // 128) * 128))

    # Sublane (batch) tile.
    rows = budget // max(1, tile_h * itemsize)
    if rows >= batch:
        tile_b = batch  # single block covers the whole batch (always legal)
    else:
        tile_b = max(sub, (rows // sub) * sub)

    # On 2-TensorCore chips prefer a batch grid that is >= 2 and even so the
    # "parallel" axis load-balances across both cores' HBM paths.
    if two_tc and batch >= 2 * sub:
        nb = pl.cdiv(batch, tile_b)
        if nb == 1:
            tile_b = _round_up(pl.cdiv(batch, 2), sub)
        elif nb % 2 == 1:
            cand = _round_up(pl.cdiv(batch, nb + 1), sub)
            if cand >= sub and pl.cdiv(batch, cand) % 2 == 0:
                tile_b = cand
    return tile_b, tile_h


def _silly_kernel(x_ref, o_ref):
    # Folded arithmetic: (+1, +2, copy, row0+1, -2, -1, copy, row0+1, +1)
    # == x + 1 everywhere, global row 0 gets an extra +2.
    y = x_ref[...] + 1
    o_ref[...] = y

    # Only batch-block 0 contains the global row 0; every hidden tile of that
    # block needs the bump, so gating on program_id(0) alone is correct.
    @pl.when(pl.program_id(0) == 0)
    def _():
        o_ref[0:1, :] = y[0:1, :] + 2


def silly_model_forward(x: jax.Array) -> jax.Array:
    """Runs the whole SillyModel forward in a single (tiled) Pallas kernel.

    x: [batch, hidden].
    """
    assert x.ndim == 2, "layout: [batch, hidden]"
    batch, hidden = x.shape
    budget, vmem_limit, two_tc = _chip_config()
    tile_b, tile_h = _pick_tiles(batch, hidden, x.dtype, budget, two_tc)
    grid = (pl.cdiv(batch, tile_b), pl.cdiv(hidden, tile_h))

    cp_kwargs = dict(dimension_semantics=("parallel", "parallel"))
    if vmem_limit is not None:
        cp_kwargs["vmem_limit_bytes"] = vmem_limit

    cost = pl.CostEstimate(
        flops=batch * hidden,
        transcendentals=0,
        bytes_accessed=2 * batch * hidden * jnp.dtype(x.dtype).itemsize,
    )

    return pl.pallas_call(
        _silly_kernel,
        out_shape=jax.ShapeDtypeStruct(x.shape, x.dtype),
        grid=grid,
        in_specs=[pl.BlockSpec((tile_b, tile_h), lambda i, j: (i, j))],
        out_specs=pl.BlockSpec((tile_b, tile_h), lambda i, j: (i, j)),
        input_output_aliases={0: 0},
        compiler_params=pltpu.CompilerParams(**cp_kwargs),
        cost_estimate=cost,
    )(x)


if __name__ == "__main__":
    key = jax.random.PRNGKey(0)

    # Primary small-shape test (consistent with the vllm unit test sizes).
    batch, hidden = 8, 32
    x = jax.random.normal(key, (batch, hidden), dtype=jnp.float32)
    ref = (x + 1.0).at[0].add(2.0)
    y = jax.block_until_ready(silly_model_forward(x))
    assert y.shape == x.shape and y.dtype == x.dtype
    assert jnp.allclose(y, ref, atol=1e-6), "mismatch vs reference (f32 small)"

    # Larger f32 case through the auto tile picker.
    x2 = jax.random.normal(jax.random.PRNGKey(1), (64, 256), dtype=jnp.float32)
    ref2 = (x2 + 1.0).at[0].add(2.0)
    y2 = jax.block_until_ready(silly_model_forward(x2))
    assert jnp.allclose(y2, ref2, atol=1e-6), "mismatch vs reference (f32 big)"

    # Hand-tiled multi-block (4 x 2 grid) path to exercise the row-0 gate
    # across both batch and hidden tiles.
    y3 = jax.block_until_ready(
        pl.pallas_call(
            _silly_kernel,
            out_shape=jax.ShapeDtypeStruct(x2.shape, x2.dtype),
            grid=(64 // 16, 256 // 128),
            in_specs=[pl.BlockSpec((16, 128), lambda i, j: (i, j))],
            out_specs=pl.BlockSpec((16, 128), lambda i, j: (i, j)),
            compiler_params=pltpu.CompilerParams(
                dimension_semantics=("parallel", "parallel")),
        )(x2))
    assert jnp.allclose(y3, ref2, atol=1e-6), "mismatch vs reference (tiled)"

    # bf16 case: exercises the dtype-aware (16-row) sublane rounding and
    # dtype-preserving integer constants.
    xb = jax.random.normal(jax.random.PRNGKey(2), (32, 256),
                           dtype=jnp.bfloat16)
    refb = (xb + 1).at[0].add(2)
    yb = jax.block_until_ready(silly_model_forward(xb))
    assert yb.dtype == jnp.bfloat16
    assert jnp.allclose(yb.astype(jnp.float32), refb.astype(jnp.float32),
                        atol=1e-2), "mismatch vs reference (bf16)"

    print("KERNEL_OK")
</pallas_src>

<mosaic_0001>
module attributes {stable_mosaic.version = 11 : i64} {
  func.func @_silly_kernel(%arg0: i32, %arg1: i32, %arg2: memref<8x32xf32, #tpu.memory_space<vmem>>, %arg3: memref<8x32xf32, #tpu.memory_space<vmem>>) attributes {dimension_semantics = [#tpu.dimension_semantics<parallel>, #tpu.dimension_semantics<parallel>], iteration_bounds = array<i64: 1, 1>, scalar_prefetch = 0 : i64, scratch_operands = 0 : i64, tpu.core_type = #tpu.core_type<tc>, window_params = [{transform_indices = @transform_0, window_bounds = array<i64: 8, 32>}, {transform_indices = @transform_1, window_bounds = array<i64: 8, 32>}]} {
    %c0 = arith.constant 0 : index
    %c0_0 = arith.constant 0 : index
    %0 = vector.load %arg2[%c0, %c0_0] : memref<8x32xf32, #tpu.memory_space<vmem>>, vector<8x32xf32>
    %cst = arith.constant 1.000000e+00 : f32
    %1 = vector.broadcast %cst : f32 to vector<8x32xf32>
    %2 = arith.addf %0, %1 : vector<8x32xf32>
    %c0_1 = arith.constant 0 : index
    %c0_2 = arith.constant 0 : index
    %3 = vector.load %arg3[%c0_1, %c0_2] : memref<8x32xf32, #tpu.memory_space<vmem>>, vector<8x32xf32>
    tpu.vector_store %arg3[%c0_1, %c0_2], %2 {strides = array<i32>} : memref<8x32xf32, #tpu.memory_space<vmem>>, vector<8x32xf32>,
    %c0_i32 = arith.constant 0 : i32
    %4 = arith.cmpi eq, %arg0, %c0_i32 : i32
    %5 = arith.extui %4 : i1 to i32
    %c0_i32_3 = arith.constant 0 : i32
    %6 = arith.cmpi ne, %5, %c0_i32_3 : i32
    scf.if %6 {
      %7 = vector.extract_strided_slice %2 {offsets = [0, 0], sizes = [1, 32], strides = [1, 1]} : vector<8x32xf32> to vector<1x32xf32>
      %cst_4 = arith.constant 2.000000e+00 : f32
      %8 = vector.broadcast %cst_4 : f32 to vector<1x32xf32>
      %9 = arith.addf %7, %8 : vector<1x32xf32>
      %c0_5 = arith.constant 0 : index
      %c0_6 = arith.constant 0 : index
      %10 = vector.load %arg3[%c0_5, %c0_6] : memref<8x32xf32, #tpu.memory_space<vmem>>, vector<1x32xf32>
      tpu.vector_store %arg3[%c0_5, %c0_6], %9 {strides = array<i32>} : memref<8x32xf32, #tpu.memory_space<vmem>>, vector<1x32xf32>,
    } else {
    }
    return
  }
  func.func @transform_0(%arg0: i32, %arg1: i32) -> (i32, i32) {
    %c0_i32 = arith.constant 0 : i32
    return %arg0, %arg1 : i32, i32
  }
  func.func @transform_1(%arg0: i32, %arg1: i32) -> (i32, i32) {
    %c0_i32 = arith.constant 0 : i32
    return %arg0, %arg1 : i32, i32
  }
}

</mosaic_0001>

<llo_original>
// kernel: tpu_custom_call.1
$region0: #{tpu_custom_call.1}
  #allocation0 [shape = 'u32[]', space=smem, size = 0x4, offset = 0x4, fixed_abs, tag = 'smem constant byte address 0x4 - core index']
  #allocation1 [shape = 'u32[144,128]{1,0:T(1,128)}', space=vmem, size = 0x12000, scoped, tag = 'internal scratch']
  %s0 = inlined_call_operand.hbm [shape: f32[8,32], index: 0, kind: input, shape index: {}, may-alias: {0,1}]
  %s1 = inlined_call_operand.hbm [shape: f32[8,32], index: 1, kind: output, shape index: {}, may-alias: {0,1}]
  %s2 = sld [smem:[#allocation0]]
  $region22: #{tpu_custom_call.1} parent=0
    _
  %s4 = ssub.s32 1, %s2
  %s5 = scalar_select 0, %s4, %s2
  $region1: #{tpu_custom_call.1} parent=0
    #allocation2 [shape = 'u8[4096]{0}', space=vmem, size = 0x1000, scoped, tag = 'input window, operand 0, single buffered']
    #allocation3 [shape = 's32[1]{0}', space=sflag, size = 0x4, scoped, tag = 'scoped memory for tpu_custom_call.1']
    #allocation4 [shape = 's32[1]{0}', space=sflag, size = 0x4, scoped, tag = 'scoped memory for tpu_custom_call.1']
    #allocation5 [shape = 'u8[4096]{0}', space=vmem, size = 0x1000, scoped, tag = 'output window, operand 0, single buffered']
    %6 = vsyncpa [#allocation3], 0
    %7 = vsyncpa [#allocation4], 0
    // Predicated region
    $region2: #{tpu_custom_call.1} parent=1 // pred_check
      _
    $region3: #{tpu_custom_call.1} parent=1 // pred_check_branch
      %9 = sbr.rel (0) target = $region5
    $region4: #{tpu_custom_call.1} parent=1 // pred_region
      %s11 = ssub.s32 128, 128
      %12 = vsyncadd [#allocation3], %s11
      %s14 = sshll.u32 [#allocation2], 4
      %s15 = int_to_ptr.vmem [resolvable:$true] %s14
      %17 = dma.hbm_to_vmem [thread:$0]  %s0, 128, %s15, [#allocation3]
    $region5: #{tpu_custom_call.1} parent=1 // pred_fallthru
      _
    // Predicated region
    $region6: #{tpu_custom_call.1} parent=1 // pred_check
      _
    $region7: #{tpu_custom_call.1} parent=1 // pred_check_branch
      %19 = sbr.rel (0) target = $region9
    $region8: #{tpu_custom_call.1} parent=1 // pred_region
      %20 = dma.done [#allocation3], 128
    $region9: #{tpu_custom_call.1} parent=1 // pred_fallthru
      _
    %v21 = vld [vmem:[#allocation2] sm:$0xff]
    %v22 = vadd.f32 %v21, 1.0
    %vm23 = vcmask 261120
    %24 = vst.msk [vmem:[#allocation5] sm:$0xff] %vm23, %v22
    %p25 = scmp.eq.s32.totalorder 0, 0
    // Predicated region
    $region10: #{tpu_custom_call.1} parent=1 // pred_check
      %p26 = pneg %p25
    $region11: #{tpu_custom_call.1} parent=1 // pred_check_branch
      %28 = sbr.rel (%p26) target = $region13
    $region12: #{tpu_custom_call.1} parent=1 // pred_region
      %v29 = vadd.f32 %v22, 2.0
      %vm30 = vcmask 253952
      %31 = vst.msk [vmem:[#allocation5] sm:$0x1] %vm30, %v29
    $region13: #{tpu_custom_call.1} parent=1 // pred_fallthru
      _
    // Predicated region
    $region14: #{tpu_custom_call.1} parent=1 // pred_check
      _
    $region15: #{tpu_custom_call.1} parent=1 // pred_check_branch
      %33 = sbr.rel (0) target = $region17
    $region16: #{tpu_custom_call.1} parent=1 // pred_region
      %s35 = ssub.s32 128, 128
      %36 = vsyncadd [#allocation4], %s35
      %s38 = sshll.u32 [#allocation5], 4
      %s39 = int_to_ptr.vmem [resolvable:$true] %s38
      %41 = dma.vmem_to_hbm [thread:$0]  %s39, 128, %s1, [#allocation4]
    $region17: #{tpu_custom_call.1} parent=1 // pred_fallthru
      _
    // Predicated region
    $region18: #{tpu_custom_call.1} parent=1 // pred_check
      _
    $region19: #{tpu_custom_call.1} parent=1 // pred_check_branch
      %43 = sbr.rel (0) target = $region21
    $region20: #{tpu_custom_call.1} parent=1 // pred_region
      %44 = dma.done [#allocation4], 128
    $region21: #{tpu_custom_call.1} parent=1 // pred_fallthru
      _
    %45 = vsyncpa [#allocation3], 1
    %46 = vsyncpa [#allocation4], 1

</llo_original>
